<compile_context>
chip_gen: v6e
topology: v6e:2x2x1
jax: 0.10.0
libtpu: 0.0.40
codegen_flags: <defaults>
</compile_context>

<pallas_src>
import numpy as np
import jax
import jax.numpy as jnp
from jax.experimental import pallas as pl
from jax.experimental.pallas import tpu as pltpu

# ---------------- constants (deterministic "parameters") ----------------
SSIM_SIZE = 11
SSIM_SIGMA = 1.5
K1, K2, L = 0.01, 0.03, 1.0
C1 = float((K1 * L) ** 2)
C2 = float((K2 * L) ** 2)
GRAY_R, GRAY_G, GRAY_B = 0.299, 0.587, 0.114   # plain Python floats (no const capture)


def _gauss_1d(size, sigma):
    k = np.arange(-size // 2 + 1, size // 2 + 1, dtype=np.float64)
    g = np.exp(-(k ** 2) / (2.0 * sigma ** 2))
    return (g / g.sum()).astype(np.float32)


def _gauss_2d(size, sigma):
    # mimics the MATLAB 'fspecial' gaussian (the gauss() in the reference)
    x, y = np.mgrid[-size // 2 + 1: size // 2 + 1, -size // 2 + 1: size // 2 + 1]
    g = np.exp(-((x ** 2 + y ** 2) / (2.0 * sigma ** 2)))
    return (g / g.sum()).astype(np.float32)


_G1D = _gauss_1d(SSIM_SIZE, SSIM_SIGMA)        # 1-D taps (window2d == outer(g1d, g1d))
_WINDOW2D = _gauss_2d(SSIM_SIZE, SSIM_SIGMA)   # used only by the pure-JAX reference


def _banded_h(W, Wo):
    # (plane @ B_h)[r, j] = sum_k g[k] * plane[r, j + k]  (horizontal VALID conv)
    m = np.zeros((W, Wo), np.float32)
    for j in range(Wo):
        for k in range(SSIM_SIZE):
            m[j + k, j] = _G1D[k]
    return m


def _banded_v(Ho, H):
    # (B_v @ h)[o, c] = sum_k g[k] * h[o + k, c]          (vertical VALID conv)
    m = np.zeros((Ho, H), np.float32)
    for o in range(Ho):
        for k in range(SSIM_SIZE):
            m[o, o + k] = _G1D[k]
    return m


# ---------------- Pallas kernel ----------------
def _make_restore_loss_kernel(B, C, H, W):
    Ho = H - SSIM_SIZE + 1
    Wo = W - SSIM_SIZE + 1

    def kernel(out_r_ref, high_r_ref, bh_ref, bv_ref, part_ref):
        bh = bh_ref[...]                     # (W, Wo)  f32, constant across grid
        bv = bv_ref[...]                     # (Ho, H)  f32, constant across grid

        def dot32(a, b):
            # MXU matmul, f32 accumulation (f32 operands are not demoted by Mosaic).
            return jnp.dot(a, b, preferred_element_type=jnp.float32)

        def channel_body(c, carry):
            sq_sum, ssim_sum, gl, gh = carry
            # Native-dtype DMA'd tile; cast one channel at a time in VMEM.
            xc = out_r_ref[0, c].astype(jnp.float32)    # (H, W)
            yc = high_r_ref[0, c].astype(jnp.float32)   # (H, W)

            # --- squared-error partial sum (per channel) ----------------------
            d = xc - yc
            sq_sum = sq_sum + jnp.sum(d * d)

            # --- grayscale accumulation (channel weight picked by scalar select)
            w = jnp.where(c == 0, GRAY_R,
                          jnp.where(c == 1, GRAY_G, GRAY_B)).astype(jnp.float32)
            gl = gl + w * xc
            gh = gh + w * yc

            # --- SSIM term: stacked (5H, W) slab, conv on the MXU --------------
            # Products are fused into the slab (never stored as separate planes).
            slab = jnp.concatenate([xc, yc, xc * xc, yc * yc, xc * yc], axis=0)
            hs = dot32(slab, bh)                          # (5H, Wo) horizontal pass
            mu1 = dot32(bv, hs[0 * H:1 * H, :])           # (Ho, Wo) vertical passes
            mu2 = dot32(bv, hs[1 * H:2 * H, :])
            e11 = dot32(bv, hs[2 * H:3 * H, :])
            e22 = dot32(bv, hs[3 * H:4 * H, :])
            e12 = dot32(bv, hs[4 * H:5 * H, :])

            mu1_sq = mu1 * mu1
            mu2_sq = mu2 * mu2
            mu1_mu2 = mu1 * mu2
            s1 = e11 - mu1_sq
            s2 = e22 - mu2_sq
            s12 = e12 - mu1_mu2
            num = (2.0 * mu1_mu2 + C1) * (2.0 * s12 + C2)
            den = (mu1_sq + mu2_sq + C1) * (s1 + s2 + C2)
            # EUP approx reciprocal + one Newton step (~f32 accuracy), no VPU divide.
            r = pl.reciprocal(den, approx=True)
            r = r * (2.0 - den * r)
            ssim_sum = ssim_sum + jnp.sum(num * r)
            return sq_sum, ssim_sum, gl, gh

        init = (jnp.float32(0.0), jnp.float32(0.0),
                jnp.zeros((H, W), jnp.float32), jnp.zeros((H, W), jnp.float32))
        sq_sum, ssim_sum, gl, gh = jax.lax.fori_loop(0, C, channel_body, init)

        # --- gradient term on grayscale ---------------------------------------
        gxl = jnp.abs(gl[1:, 1:] - gl[1:, :-1])
        gxh = jnp.abs(gh[1:, 1:] - gh[1:, :-1])
        gyl = jnp.abs(gl[1:, 1:] - gl[:-1, 1:])
        gyh = jnp.abs(gh[1:, 1:] - gh[:-1, 1:])
        grad_sum = jnp.sum((gxl - gxh) ** 2 + (gyl - gyh) ** 2)

        # --- per-batch partial sums (lane-dense, no shared accumulator) --------
        part_ref[0] = jnp.concatenate(
            [jnp.full((1, 128), sq_sum, jnp.float32),
             jnp.full((1, 128), grad_sum, jnp.float32),
             jnp.full((1, 128), ssim_sum, jnp.float32)], axis=0)

    return kernel


# ---------------- wrapper ----------------
def restore_loss(output_r, input_high_r):
    assert output_r.shape == input_high_r.shape
    B, C, H, W = output_r.shape
    assert C == 3, "restore_loss expects 3-channel (RGB) inputs"
    assert H >= SSIM_SIZE and W >= SSIM_SIZE
    Ho, Wo = H - SSIM_SIZE + 1, W - SSIM_SIZE + 1

    bh = jnp.asarray(_banded_h(W, Wo))   # (W, Wo)
    bv = jnp.asarray(_banded_v(Ho, H))   # (Ho, H)

    kernel = _make_restore_loss_kernel(B, C, H, W)

    # Per-step VMEM budget: 2 inputs x 2 (double buffer) x one-batch native-dtype
    # tile + per-channel f32 temporaries (slab, conv outputs, gray carriers, grad
    # temps) + banded matrices + slack.  Clamp to [32 MiB, 75% of physical VMEM]
    # (generation-aware: ~48 MiB cap on v7x, ~96 MiB on v5e/v6e).
    itemsize = jnp.dtype(output_r.dtype).itemsize
    tile_bytes = C * H * W * itemsize
    est = 4 * tile_bytes + 24 * H * W * 4 + 8 * (W * Wo + Ho * H) + (2 << 20)
    try:
        vmem_cap = int(getattr(pltpu.get_tpu_info(), "vmem_capacity_bytes",
                               64 * 2 ** 20))
    except Exception:
        vmem_cap = 64 * 2 ** 20
    vmem_limit = int(min(max(est, 32 * 2 ** 20), (vmem_cap * 3) // 4))

    parts = pl.pallas_call(
        kernel,
        out_shape=jax.ShapeDtypeStruct((B, 3, 128), jnp.float32),
        grid_spec=pltpu.PrefetchScalarGridSpec(
            num_scalar_prefetch=0,
            grid=(B,),
            in_specs=[
                pl.BlockSpec((1, C, H, W), lambda b: (b, 0, 0, 0)),
                pl.BlockSpec((1, C, H, W), lambda b: (b, 0, 0, 0)),
                pl.BlockSpec((W, Wo), lambda b: (0, 0)),
                pl.BlockSpec((Ho, H), lambda b: (0, 0)),
            ],
            out_specs=pl.BlockSpec((1, 3, 128), lambda b: (b, 0, 0)),
        ),
        compiler_params=pltpu.CompilerParams(
            # Each grid step writes its own output block -> batch axis is safely
            # "parallel" (megacore sharding on v7x; no-op on single-TC v5e/v6e).
            dimension_semantics=("parallel",),
            vmem_limit_bytes=vmem_limit,
        ),
    )(output_r, input_high_r, bh, bv)

    sums = parts[:, :, 0]                 # (B, 3) per-batch partial sums
    sq_sum = jnp.sum(sums[:, 0])
    grad_sum = jnp.sum(sums[:, 1])
    ssim_sum = jnp.sum(sums[:, 2])
    inv_n_sq = 1.0 / float(B * C * H * W)
    inv_n_gr = 1.0 / float(B * (H - 1) * (W - 1))
    inv_n_ss = 1.0 / float(B * C * Ho * Wo)
    return sq_sum * inv_n_sq + grad_sum * inv_n_gr + (1.0 - ssim_sum * inv_n_ss)


# ---------------- pure-JAX reference (for correctness check) ----------------
def _reference_loss(x, y):
    win = jnp.asarray(_WINDOW2D)[None, None]  # (1,1,11,11)

    def conv(img):  # img: (B,1,H,W), VALID conv, f32-accurate on TPU
        return jax.lax.conv_general_dilated(
            img, win, (1, 1), "VALID",
            dimension_numbers=("NCHW", "OIHW", "NCHW"),
            precision=jax.lax.Precision.HIGHEST)

    def ssim_c(i1, i2):
        mu1, mu2 = conv(i1), conv(i2)
        s1 = conv(i1 * i1) - mu1 * mu1
        s2 = conv(i2 * i2) - mu2 * mu2
        s12 = conv(i1 * i2) - mu1 * mu2
        val = ((2 * mu1 * mu2 + C1) * (2 * s12 + C2)
               / ((mu1 * mu1 + mu2 * mu2 + C1) * (s1 + s2 + C2)))
        return jnp.mean(val)

    ssim_r = sum(ssim_c(x[:, c:c + 1], y[:, c:c + 1]) for c in range(3)) / 3.0
    loss_ssim = 1.0 - ssim_r

    gl = GRAY_R * x[:, 0] + GRAY_G * x[:, 1] + GRAY_B * x[:, 2]
    gh = GRAY_R * y[:, 0] + GRAY_G * y[:, 1] + GRAY_B * y[:, 2]

    def grad2(img, d):
        if d == "x":
            return jnp.abs(img[:, 1:, 1:] - img[:, 1:, :-1])
        return jnp.abs(img[:, 1:, 1:] - img[:, :-1, 1:])

    loss_grad = jnp.mean((grad2(gl, "x") - grad2(gh, "x")) ** 2
                         + (grad2(gl, "y") - grad2(gh, "y")) ** 2)
    loss_square = jnp.mean((x - y) ** 2)
    return loss_square + loss_grad + loss_ssim


if __name__ == "__main__":
    key = jax.random.PRNGKey(0)
    k1, k2 = jax.random.split(key)
    B, C, H, W = 2, 3, 16, 16
    output_r = jax.random.uniform(k1, (B, C, H, W), dtype=jnp.float32)
    input_high_r = jax.random.uniform(k2, (B, C, H, W), dtype=jnp.float32)

    loss = restore_loss(output_r, input_high_r)
    loss = jax.block_until_ready(loss)

    ref = _reference_loss(output_r, input_high_r)
    assert bool(jnp.isfinite(loss)), f"non-finite loss: {loss}"
    # Tolerance allows for MXU f32 pass-count / accumulation-order differences vs
    # the HIGHEST-precision XLA conv reference.
    assert abs(float(loss) - float(ref)) < 1e-3, (float(loss), float(ref))
    print("KERNEL_OK")
</pallas_src>

<mosaic_0001>
module attributes {stable_mosaic.version = 11 : i64} {
  func.func @kernel(%arg0: i32, %arg1: memref<1x3x16x16xf32, #tpu.memory_space<vmem>>, %arg2: memref<1x3x16x16xf32, #tpu.memory_space<vmem>>, %arg3: memref<16x6xf32, #tpu.memory_space<vmem>>, %arg4: memref<6x16xf32, #tpu.memory_space<vmem>>, %arg5: memref<1x3x128xf32, #tpu.memory_space<vmem>>) attributes {dimension_semantics = [#tpu.dimension_semantics<parallel>], iteration_bounds = array<i64: 2>, scalar_prefetch = 0 : i64, scratch_operands = 0 : i64, tpu.core_type = #tpu.core_type<tc>, window_params = [{transform_indices = @transform_0, window_bounds = array<i64: 1, 3, 16, 16>}, {transform_indices = @transform_1, window_bounds = array<i64: 1, 3, 16, 16>}, {pipeline_mode = #tpu.pipeline_mode<synchronous>, transform_indices = @transform_2, window_bounds = array<i64: 16, 6>}, {pipeline_mode = #tpu.pipeline_mode<synchronous>, transform_indices = @transform_3, window_bounds = array<i64: 6, 16>}, {transform_indices = @transform_4, window_bounds = array<i64: 1, 3, 128>}]} {
    %c0 = arith.constant 0 : index
    %c0_0 = arith.constant 0 : index
    %0 = vector.load %arg3[%c0, %c0_0] : memref<16x6xf32, #tpu.memory_space<vmem>>, vector<16x6xf32>
    %c0_1 = arith.constant 0 : index
    %c0_2 = arith.constant 0 : index
    %1 = vector.load %arg4[%c0_1, %c0_2] : memref<6x16xf32, #tpu.memory_space<vmem>>, vector<6x16xf32>
    %cst = arith.constant 0.000000e+00 : f32
    %2 = vector.broadcast %cst : f32 to vector<16x16xf32>
    %cst_3 = arith.constant 0.000000e+00 : f32
    %3 = vector.broadcast %cst_3 : f32 to vector<16x16xf32>
    %cst_4 = arith.constant 0.000000e+00 : f32
    %cst_5 = arith.constant 0.000000e+00 : f32
    %c0_i32 = arith.constant 0 : i32
    %c3_i32 = arith.constant 3 : i32
    %4 = arith.addi %c0_i32, %c3_i32 : i32
    %c1_i32 = arith.constant 1 : i32
    %5:4 = scf.for %arg6 = %c0_i32 to %4 step %c1_i32 iter_args(%arg7 = %cst_4, %arg8 = %cst_5, %arg9 = %2, %arg10 = %3) -> (f32, f32, vector<16x16xf32>, vector<16x16xf32>)  : i32 {
      %c0_11 = arith.constant 0 : index
      %38 = arith.index_cast %arg6 : i32 to index
      %c0_12 = arith.constant 0 : index
      %c0_13 = arith.constant 0 : index
      %39 = vector.load %arg1[%c0_11, %38, %c0_12, %c0_13] : memref<1x3x16x16xf32, #tpu.memory_space<vmem>>, vector<1x1x16x16xf32>
      %40 = vector.shape_cast %39 : vector<1x1x16x16xf32> to vector<16x16xf32>
      %c0_14 = arith.constant 0 : index
      %41 = arith.index_cast %arg6 : i32 to index
      %c0_15 = arith.constant 0 : index
      %c0_16 = arith.constant 0 : index
      %42 = vector.load %arg2[%c0_14, %41, %c0_15, %c0_16] : memref<1x3x16x16xf32, #tpu.memory_space<vmem>>, vector<1x1x16x16xf32>
      %43 = vector.shape_cast %42 : vector<1x1x16x16xf32> to vector<16x16xf32>
      %44 = arith.subf %40, %43 : vector<16x16xf32>
      %45 = arith.mulf %44, %44 : vector<16x16xf32>
      %46 = vector.shape_cast %45 : vector<16x16xf32> to vector<1x16x16xf32>
      %cst_17 = arith.constant dense<0.000000e+00> : vector<1xf32>
      %47 = vector.multi_reduction <add>, %46, %cst_17 [1, 2] : vector<1x16x16xf32> to vector<1xf32>
      %48 = vector.shape_cast %47 : vector<1xf32> to vector<1x1x1xf32>
      %49 = vector.extract %48[0, 0, 0] : f32 from vector<1x1x1xf32>
      %50 = arith.addf %arg7, %49 : f32
      %c0_i32_18 = arith.constant 0 : i32
      %51 = arith.cmpi eq, %arg6, %c0_i32_18 : i32
      %c1_i32_19 = arith.constant 1 : i32
      %52 = arith.cmpi eq, %arg6, %c1_i32_19 : i32
      %cst_20 = arith.constant 5.870000e-01 : f32
      %cst_21 = arith.constant 1.140000e-01 : f32
      %53 = arith.select %52, %cst_20, %cst_21 : f32
      %cst_22 = arith.constant 2.990000e-01 : f32
      %54 = arith.select %51, %cst_22, %53 : f32
      %55 = vector.broadcast %54 : f32 to vector<16x16xf32>
      %56 = arith.mulf %55, %40 : vector<16x16xf32>
      %57 = arith.addf %arg9, %56 : vector<16x16xf32>
      %58 = vector.broadcast %54 : f32 to vector<16x16xf32>
      %59 = arith.mulf %58, %43 : vector<16x16xf32>
      %60 = arith.addf %arg10, %59 : vector<16x16xf32>
      %61 = arith.mulf %40, %40 : vector<16x16xf32>
      %62 = arith.mulf %43, %43 : vector<16x16xf32>
      %63 = arith.mulf %40, %43 : vector<16x16xf32>
      %64 = tpu.concatenate %40, %43, %61, %62, %63 in 0 : vector<16x16xf32>, vector<16x16xf32>, vector<16x16xf32>, vector<16x16xf32>, vector<16x16xf32> -> vector<80x16xf32>
      %cst_23 = arith.constant dense<0.000000e+00> : vector<80x6xf32>
      %65 = tpu.matmul %64, %0, %cst_23 {dimension_numbers = #tpu.dot_dimension_numbers<[1], [0], [0], [1], [0, 0, 1, 1], [], []>} : vector<80x16xf32>, vector<16x6xf32>, vector<80x6xf32> -> vector<80x6xf32>
      %66 = vector.extract_strided_slice %65 {offsets = [0, 0], sizes = [16, 6], strides = [1, 1]} : vector<80x6xf32> to vector<16x6xf32>
      %cst_24 = arith.constant dense<0.000000e+00> : vector<6x6xf32>
      %67 = tpu.matmul %1, %66, %cst_24 {dimension_numbers = #tpu.dot_dimension_numbers<[1], [0], [0], [1], [0, 0, 1, 1], [], []>} : vector<6x16xf32>, vector<16x6xf32>, vector<6x6xf32> -> vector<6x6xf32>
      %68 = vector.extract_strided_slice %65 {offsets = [16, 0], sizes = [16, 6], strides = [1, 1]} : vector<80x6xf32> to vector<16x6xf32>
      %cst_25 = arith.constant dense<0.000000e+00> : vector<6x6xf32>
      %69 = tpu.matmul %1, %68, %cst_25 {dimension_numbers = #tpu.dot_dimension_numbers<[1], [0], [0], [1], [0, 0, 1, 1], [], []>} : vector<6x16xf32>, vector<16x6xf32>, vector<6x6xf32> -> vector<6x6xf32>
      %70 = vector.extract_strided_slice %65 {offsets = [32, 0], sizes = [16, 6], strides = [1, 1]} : vector<80x6xf32> to vector<16x6xf32>
      %cst_26 = arith.constant dense<0.000000e+00> : vector<6x6xf32>
      %71 = tpu.matmul %1, %70, %cst_26 {dimension_numbers = #tpu.dot_dimension_numbers<[1], [0], [0], [1], [0, 0, 1, 1], [], []>} : vector<6x16xf32>, vector<16x6xf32>, vector<6x6xf32> -> vector<6x6xf32>
      %72 = vector.extract_strided_slice %65 {offsets = [48, 0], sizes = [16, 6], strides = [1, 1]} : vector<80x6xf32> to vector<16x6xf32>
      %cst_27 = arith.constant dense<0.000000e+00> : vector<6x6xf32>
      %73 = tpu.matmul %1, %72, %cst_27 {dimension_numbers = #tpu.dot_dimension_numbers<[1], [0], [0], [1], [0, 0, 1, 1], [], []>} : vector<6x16xf32>, vector<16x6xf32>, vector<6x6xf32> -> vector<6x6xf32>
      %74 = vector.extract_strided_slice %65 {offsets = [64, 0], sizes = [16, 6], strides = [1, 1]} : vector<80x6xf32> to vector<16x6xf32>
      %cst_28 = arith.constant dense<0.000000e+00> : vector<6x6xf32>
      %75 = tpu.matmul %1, %74, %cst_28 {dimension_numbers = #tpu.dot_dimension_numbers<[1], [0], [0], [1], [0, 0, 1, 1], [], []>} : vector<6x16xf32>, vector<16x6xf32>, vector<6x6xf32> -> vector<6x6xf32>
      %76 = arith.mulf %67, %67 : vector<6x6xf32>
      %77 = arith.mulf %69, %69 : vector<6x6xf32>
      %78 = arith.mulf %67, %69 : vector<6x6xf32>
      %79 = arith.subf %71, %76 : vector<6x6xf32>
      %80 = arith.subf %73, %77 : vector<6x6xf32>
      %81 = arith.subf %75, %78 : vector<6x6xf32>
      %cst_29 = arith.constant 2.000000e+00 : f32
      %82 = vector.broadcast %cst_29 : f32 to vector<6x6xf32>
      %83 = arith.mulf %82, %78 : vector<6x6xf32>
      %cst_30 = arith.constant 9.99999974E-5 : f32
      %84 = vector.broadcast %cst_30 : f32 to vector<6x6xf32>
      %85 = arith.addf %83, %84 : vector<6x6xf32>
      %cst_31 = arith.constant 2.000000e+00 : f32
      %86 = vector.broadcast %cst_31 : f32 to vector<6x6xf32>
      %87 = arith.mulf %86, %81 : vector<6x6xf32>
      %cst_32 = arith.constant 8.99999984E-4 : f32
      %88 = vector.broadcast %cst_32 : f32 to vector<6x6xf32>
      %89 = arith.addf %87, %88 : vector<6x6xf32>
      %90 = arith.mulf %85, %89 : vector<6x6xf32>
      %91 = arith.addf %76, %77 : vector<6x6xf32>
      %cst_33 = arith.constant 9.99999974E-5 : f32
      %92 = vector.broadcast %cst_33 : f32 to vector<6x6xf32>
      %93 = arith.addf %91, %92 : vector<6x6xf32>
      %94 = arith.addf %79, %80 : vector<6x6xf32>
      %cst_34 = arith.constant 8.99999984E-4 : f32
      %95 = vector.broadcast %cst_34 : f32 to vector<6x6xf32>
      %96 = arith.addf %94, %95 : vector<6x6xf32>
      %97 = arith.mulf %93, %96 : vector<6x6xf32>
      %98 = tpu.reciprocal %97 {approx = true} : vector<6x6xf32> -> vector<6x6xf32>
      %99 = arith.mulf %97, %98 : vector<6x6xf32>
      %cst_35 = arith.constant 2.000000e+00 : f32
      %100 = vector.broadcast %cst_35 : f32 to vector<6x6xf32>
      %101 = arith.subf %100, %99 : vector<6x6xf32>
      %102 = arith.mulf %98, %101 : vector<6x6xf32>
      %103 = arith.mulf %90, %102 : vector<6x6xf32>
      %104 = vector.shape_cast %103 : vector<6x6xf32> to vector<1x6x6xf32>
      %cst_36 = arith.constant dense<0.000000e+00> : vector<1xf32>
      %105 = vector.multi_reduction <add>, %104, %cst_36 [1, 2] : vector<1x6x6xf32> to vector<1xf32>
      %106 = vector.shape_cast %105 : vector<1xf32> to vector<1x1x1xf32>
      %107 = vector.extract %106[0, 0, 0] : f32 from vector<1x1x1xf32>
      %108 = arith.addf %arg8, %107 : f32
      scf.yield %50, %108, %57, %60 : f32, f32, vector<16x16xf32>, vector<16x16xf32>
    }
    %c3_i32_6 = arith.constant 3 : i32
    %6 = vector.extract_strided_slice %5#2 {offsets = [1, 1], sizes = [15, 15], strides = [1, 1]} : vector<16x16xf32> to vector<15x15xf32>
    %7 = vector.extract_strided_slice %5#2 {offsets = [1, 0], sizes = [15, 15], strides = [1, 1]} : vector<16x16xf32> to vector<15x15xf32>
    %8 = arith.subf %6, %7 : vector<15x15xf32>
    %9 = math.absf %8 : vector<15x15xf32>
    %10 = vector.extract_strided_slice %5#3 {offsets = [1, 1], sizes = [15, 15], strides = [1, 1]} : vector<16x16xf32> to vector<15x15xf32>
    %11 = vector.extract_strided_slice %5#3 {offsets = [1, 0], sizes = [15, 15], strides = [1, 1]} : vector<16x16xf32> to vector<15x15xf32>
    %12 = arith.subf %10, %11 : vector<15x15xf32>
    %13 = math.absf %12 : vector<15x15xf32>
    %14 = vector.extract_strided_slice %5#2 {offsets = [1, 1], sizes = [15, 15], strides = [1, 1]} : vector<16x16xf32> to vector<15x15xf32>
    %15 = vector.extract_strided_slice %5#2 {offsets = [0, 1], sizes = [15, 15], strides = [1, 1]} : vector<16x16xf32> to vector<15x15xf32>
    %16 = arith.subf %14, %15 : vector<15x15xf32>
    %17 = math.absf %16 : vector<15x15xf32>
    %18 = vector.extract_strided_slice %5#3 {offsets = [1, 1], sizes = [15, 15], strides = [1, 1]} : vector<16x16xf32> to vector<15x15xf32>
    %19 = vector.extract_strided_slice %5#3 {offsets = [0, 1], sizes = [15, 15], strides = [1, 1]} : vector<16x16xf32> to vector<15x15xf32>
    %20 = arith.subf %18, %19 : vector<15x15xf32>
    %21 = math.absf %20 : vector<15x15xf32>
    %22 = arith.subf %9, %13 : vector<15x15xf32>
    %23 = arith.mulf %22, %22 : vector<15x15xf32>
    %24 = arith.subf %17, %21 : vector<15x15xf32>
    %25 = arith.mulf %24, %24 : vector<15x15xf32>
    %26 = arith.addf %23, %25 : vector<15x15xf32>
    %27 = vector.shape_cast %26 : vector<15x15xf32> to vector<1x15x15xf32>
    %cst_7 = arith.constant dense<0.000000e+00> : vector<1xf32>
    %28 = vector.multi_reduction <add>, %27, %cst_7 [1, 2] : vector<1x15x15xf32> to vector<1xf32>
    %29 = vector.shape_cast %28 : vector<1xf32> to vector<1x1x1xf32>
    %30 = vector.extract %29[0, 0, 0] : f32 from vector<1x1x1xf32>
    %31 = vector.broadcast %5#0 : f32 to vector<1x128xf32>
    %32 = vector.broadcast %30 : f32 to vector<1x128xf32>
    %33 = vector.broadcast %5#1 : f32 to vector<1x128xf32>
    %34 = tpu.concatenate %31, %32, %33 in 0 : vector<1x128xf32>, vector<1x128xf32>, vector<1x128xf32> -> vector<3x128xf32>
    %c0_8 = arith.constant 0 : index
    %c0_9 = arith.constant 0 : index
    %c0_10 = arith.constant 0 : index
    %35 = vector.load %arg5[%c0_8, %c0_9, %c0_10] : memref<1x3x128xf32, #tpu.memory_space<vmem>>, vector<1x3x128xf32>
    %36 = vector.shape_cast %35 : vector<1x3x128xf32> to vector<3x128xf32>
    %37 = vector.shape_cast %34 : vector<3x128xf32> to vector<1x3x128xf32>
    tpu.vector_store %arg5[%c0_8, %c0_9, %c0_10], %37 {strides = array<i32>} : memref<1x3x128xf32, #tpu.memory_space<vmem>>, vector<1x3x128xf32>,
    return
  }
  func.func @transform_0(%arg0: i32) -> (i32, i32, i32, i32) {
    %c0_i32 = arith.constant 0 : i32
    %c0_i32_0 = arith.constant 0 : i32
    %c0_i32_1 = arith.constant 0 : i32
    %c0_i32_2 = arith.constant 0 : i32
    return %arg0, %c0_i32, %c0_i32_0, %c0_i32_1 : i32, i32, i32, i32
  }
  func.func @transform_1(%arg0: i32) -> (i32, i32, i32, i32) {
    %c0_i32 = arith.constant 0 : i32
    %c0_i32_0 = arith.constant 0 : i32
    %c0_i32_1 = arith.constant 0 : i32
    %c0_i32_2 = arith.constant 0 : i32
    return %arg0, %c0_i32, %c0_i32_0, %c0_i32_1 : i32, i32, i32, i32
  }
  func.func @transform_2(%arg0: i32) -> (i32, i32) {
    %c0_i32 = arith.constant 0 : i32
    %c0_i32_0 = arith.constant 0 : i32
    %c0_i32_1 = arith.constant 0 : i32
    return %c0_i32, %c0_i32_0 : i32, i32
  }
  func.func @transform_3(%arg0: i32) -> (i32, i32) {
    %c0_i32 = arith.constant 0 : i32
    %c0_i32_0 = arith.constant 0 : i32
    %c0_i32_1 = arith.constant 0 : i32
    return %c0_i32, %c0_i32_0 : i32, i32
  }
  func.func @transform_4(%arg0: i32) -> (i32, i32, i32) {
    %c0_i32 = arith.constant 0 : i32
    %c0_i32_0 = arith.constant 0 : i32
    %c0_i32_1 = arith.constant 0 : i32
    return %arg0, %c0_i32, %c0_i32_0 : i32, i32, i32
  }
}

</mosaic_0001>

<llo_original>
// kernel: tpu_custom_call.1
$region0: #{tpu_custom_call.1}
  #allocation0 [shape = 'u32[]', space=smem, size = 0x4, offset = 0x4, fixed_abs, tag = 'smem constant byte address 0x4 - core index']
  #allocation1 [shape = 'u32[144,128]{1,0:T(1,128)}', space=vmem, size = 0x12000, scoped, tag = 'internal scratch']
  %s0 = inlined_call_operand.hbm [shape: f32[2,3,16,16], index: 0, kind: input, shape index: {}]
  %s1 = inlined_call_operand.hbm [shape: f32[2,3,16,16], index: 1, kind: input, shape index: {}]
  %s2 = inlined_call_operand.vmem [shape: f32[16,6], index: 2, kind: input, shape index: {}]
  %s3 = inlined_call_operand.vmem [shape: f32[6,16], index: 3, kind: input, shape index: {}]
  %s4 = inlined_call_operand.vmem [shape: f32[2,3,128], index: 4, kind: output, shape index: {}]
  %s5 = sld [smem:[#allocation0]]
  $region64: #{tpu_custom_call.1} parent=0
    _
  %s7 = ssub.s32 1, %s5
  %s8 = scalar_select 0, %s7, %s5
  $region1: #{tpu_custom_call.1} parent=0
    #allocation2 [shape = 'u8[49152]{0}', space=vmem, size = 0xc000, scoped, tag = 'input window, operand 0']
    #allocation3 [shape = 's32[2]{0}', space=sflag, size = 0x8, scoped, tag = 'scoped memory for tpu_custom_call.1']
    #allocation4 [shape = 'u8[49152]{0}', space=vmem, size = 0xc000, scoped, tag = 'input window, operand 1']
    #allocation5 [shape = 's32[2]{0}', space=sflag, size = 0x8, scoped, tag = 'scoped memory for tpu_custom_call.1']
    %9 = vsyncpa [#allocation3], 0
    %s10 = scalar_lea.sflag [#allocation3], 1
    %11 = vsyncpa %s10, 0
    %12 = vsyncpa [#allocation5], 0
    %s13 = scalar_lea.sflag [#allocation5], 1
    %14 = vsyncpa %s13, 0
    loop: start=0, step=1, limit=4
    $region2: #{tpu_custom_call.1} parent=1 // loop_pre_header
      _
    $region3: #{tpu_custom_call.1} parent=1 // loop_header
      %s16 = sphi 0, %s20
      %p17 = scmp.ge.s32.totalorder %s16, 4
      %s26 = sphi 0, %s28
      %s29 = sphi 0, %s26
      %s30 = sphi 0, %s29
      %s46 = sphi 0, %s30
      %s52 = sphi 0, %s54
      %s55 = sphi 0, %s52
      %s56 = sphi 0, %s55
      %s72 = sphi 0, %s56
      %s76 = sphi 0, %s76
      %s78 = sphi 0, %s76
      %s79 = sphi 0, %s78
      %s93 = sphi 0, %s79
      %s97 = sphi 0, %s97
      %s99 = sphi 0, %s97
      %s100 = sphi 0, %s99
      %s114 = sphi 0, %s100
      %s120 = sphi 0, %s122
      %s123 = sphi 0, %s120
      %s124 = sphi 0, %s123
      %s140 = sphi 0, %s124
    $region4: #{tpu_custom_call.1} parent=1 // loop_header_branch
      %19 = sbr.rel (%p17) target = $region8
    $region5: #{tpu_custom_call.1} parent=1 // loop_body
      %s21 = ssub.s32 %s16, 1
      %s22 = ssub.s32 %s16, 2
      %s23 = sadd.s32 %s16, 1
      %s24 = ssub.s32 %s16, %s23
      %p25 = scmp.eq.s32.totalorder %s24, 0
      %s27 = sadd.s32 %s26, 1
      %s28 = scalar_select %p25, %s26, %s27
      %p31 = pneg %p25
      %p32 = scmp.eq.s32.totalorder %s16, 1
      %p33 = por %p31, %p32
      %p34 = scmp.ne.s32.totalorder %s26, %s29
      %p35 = scmp.eq.s32.totalorder %s16, 0
      %p36 = por %p34, %p35
      %p37 = scmp.ne.s32.totalorder %s26, %s29
      %p38 = scmp.eq.s32.totalorder %s21, 1
      %p39 = por %p37, %p38
      %p40 = scmp.ne.s32.totalorder %s29, %s30
      %p41 = scmp.eq.s32.totalorder %s21, 0
      %p42 = por %p40, %p41
      %p43 = scmp.ne.s32.totalorder %s29, %s30
      %p44 = scmp.eq.s32.totalorder %s22, 1
      %p45 = por %p43, %p44
      %p47 = scmp.ne.s32.totalorder %s30, %s46
      %p48 = scmp.eq.s32.totalorder %s22, 0
      %p49 = por %p47, %p48
      %s50 = ssub.s32 %s16, %s23
      %p51 = scmp.eq.s32.totalorder %s50, 0
      %s53 = sadd.s32 %s52, 1
      %s54 = scalar_select %p51, %s52, %s53
      %p57 = pneg %p51
      %p58 = scmp.eq.s32.totalorder %s16, 1
      %p59 = por %p57, %p58
      %p60 = scmp.ne.s32.totalorder %s52, %s55
      %p61 = scmp.eq.s32.totalorder %s16, 0
      %p62 = por %p60, %p61
      %p63 = scmp.ne.s32.totalorder %s52, %s55
      %p64 = scmp.eq.s32.totalorder %s21, 1
      %p65 = por %p63, %p64
      %p66 = scmp.ne.s32.totalorder %s55, %s56
      %p67 = scmp.eq.s32.totalorder %s21, 0
      %p68 = por %p66, %p67
      %p69 = scmp.ne.s32.totalorder %s55, %s56
      %p70 = scmp.eq.s32.totalorder %s22, 1
      %p71 = por %p69, %p70
      %p73 = scmp.ne.s32.totalorder %s56, %s72
      %p74 = scmp.eq.s32.totalorder %s22, 0
      %p75 = por %p73, %p74
      %s77 = sadd.s32 %s76, 1
      %p80 = scmp.eq.s32.totalorder %s16, 1
      %p81 = scmp.ne.s32.totalorder %s76, %s78
      %p82 = scmp.eq.s32.totalorder %s16, 0
      %p83 = por %p81, %p82
      %p84 = scmp.ne.s32.totalorder %s76, %s78
      %p85 = scmp.eq.s32.totalorder %s21, 1
      %p86 = por %p84, %p85
      %p87 = scmp.ne.s32.totalorder %s78, %s79
      %p88 = scmp.eq.s32.totalorder %s21, 0
      %p89 = por %p87, %p88
      %p90 = scmp.ne.s32.totalorder %s78, %s79
      %p91 = scmp.eq.s32.totalorder %s22, 1
      %p92 = por %p90, %p91
      %p94 = scmp.ne.s32.totalorder %s79, %s93
      %p95 = scmp.eq.s32.totalorder %s22, 0
      %p96 = por %p94, %p95
      %s98 = sadd.s32 %s97, 1
      %p101 = scmp.eq.s32.totalorder %s16, 1
      %p102 = scmp.ne.s32.totalorder %s97, %s99
      %p103 = scmp.eq.s32.totalorder %s16, 0
      %p104 = por %p102, %p103
      %p105 = scmp.ne.s32.totalorder %s97, %s99
      %p106 = scmp.eq.s32.totalorder %s21, 1
      %p107 = por %p105, %p106
      %p108 = scmp.ne.s32.totalorder %s99, %s100
      %p109 = scmp.eq.s32.totalorder %s21, 0
      %p110 = por %p108, %p109
      %p111 = scmp.ne.s32.totalorder %s99, %s100
      %p112 = scmp.eq.s32.totalorder %s22, 1
      %p113 = por %p111, %p112
      %p115 = scmp.ne.s32.totalorder %s100, %s114
      %p116 = scmp.eq.s32.totalorder %s22, 0
      %p117 = por %p115, %p116
      %s118 = ssub.s32 %s16, %s23
      %p119 = scmp.eq.s32.totalorder %s118, 0
      %s121 = sadd.s32 %s120, 1
      %s122 = scalar_select %p119, %s120, %s121
      %p125 = pneg %p119
      %p126 = scmp.eq.s32.totalorder %s16, 1
      %p127 = por %p125, %p126
      %p128 = scmp.ne.s32.totalorder %s120, %s123
      %p129 = scmp.eq.s32.totalorder %s16, 0
      %p130 = por %p128, %p129
      %p131 = scmp.ne.s32.totalorder %s120, %s123
      %p132 = scmp.eq.s32.totalorder %s21, 1
      %p133 = por %p131, %p132
      %p134 = scmp.ne.s32.totalorder %s123, %s124
      %p135 = scmp.eq.s32.totalorder %s21, 0
      %p136 = por %p134, %p135
      %p137 = scmp.ne.s32.totalorder %s123, %s124
      %p138 = scmp.eq.s32.totalorder %s22, 1
      %p139 = por %p137, %p138
      %p141 = scmp.ne.s32.totalorder %s124, %s140
      %p142 = scmp.eq.s32.totalorder %s22, 0
      %p143 = por %p141, %p142
      %p144 = scmp.le.s32.totalorder 1, %s16
      %p145 = scmp.lt.s32.totalorder %s16, 3
      %p146 = pnand %p144, %p145
      %p147 = pneg %p146
      // Predicated region
      $region9: #{tpu_custom_call.1} parent=5 // pred_check
        _
      $region10: #{tpu_custom_call.1} parent=5 // pred_check_branch
        %149 = sbr.rel (%p146) target = $region12
      $region11: #{tpu_custom_call.1} parent=5 // pred_region
        %s150 = ssub.s32 %s16, 1
        // Predicated region
        $region13: #{tpu_custom_call.1} parent=11 // pred_check
          %p151 = pneg %p89
        $region14: #{tpu_custom_call.1} parent=11 // pred_check_branch
          %153 = sbr.rel (%p151) target = $region16
        $region15: #{tpu_custom_call.1} parent=11 // pred_region
          _
        $region16: #{tpu_custom_call.1} parent=11 // pred_fallthru
          _
        // Predicated region
        $region17: #{tpu_custom_call.1} parent=11 // pred_check
          %p154 = pneg %p110
        $region18: #{tpu_custom_call.1} parent=11 // pred_check_branch
          %156 = sbr.rel (%p154) target = $region20
        $region19: #{tpu_custom_call.1} parent=11 // pred_region
          _
        $region20: #{tpu_custom_call.1} parent=11 // pred_fallthru
          _
      $region12: #{tpu_custom_call.1} parent=5 // pred_fallthru
        _
      %p157 = scmp.lt.s32.totalorder %s16, 2
      // Predicated region
      $region21: #{tpu_custom_call.1} parent=5 // pred_check
        %p158 = pneg %p157
      $region22: #{tpu_custom_call.1} parent=5 // pred_check_branch
        %160 = sbr.rel (%p158) target = $region24
      $region23: #{tpu_custom_call.1} parent=5 // pred_region
        // Predicated region
        $region25: #{tpu_custom_call.1} parent=23 // pred_check
          %p161 = pneg %p36
        $region26: #{tpu_custom_call.1} parent=23 // pred_check_branch
          %163 = sbr.rel (%p161) target = $region28
        $region27: #{tpu_custom_call.1} parent=23 // pred_region
          %s164 = sand.u32 %s26, 1
          %s165 = scalar_lea.sflag [#allocation3], %s164
          %s166 = sand.u32 %s26, 1
          %s167 = smul.addr %s166, 48
          %s168 = scalar_lea.vmem [#allocation2], %s167
          %s170 = ssub.s32 768, 768
          %171 = vsyncadd %s165, %s170
          %s172 = smul.addr %s16, 6
          %s173 = smul.addr %s172, 128
          %s174 = scalar_lea.hbm %s0, %s173
          %s175 = sshll.u32 %s168, 4
          %s176 = int_to_ptr.vmem [resolvable:$true] %s175
          %181 = dma.hbm_to_vmem [thread:$0]  %s174, 768, %s176, %s165, 128, 128, 8
        $region28: #{tpu_custom_call.1} parent=23 // pred_fallthru
          _
        // Predicated region
        $region29: #{tpu_custom_call.1} parent=23 // pred_check
          %p182 = pneg %p62
        $region30: #{tpu_custom_call.1} parent=23 // pred_check_branch
          %184 = sbr.rel (%p182) target = $region32
        $region31: #{tpu_custom_call.1} parent=23 // pred_region
          %s185 = sand.u32 %s52, 1
          %s186 = scalar_lea.sflag [#allocation5], %s185
          %s187 = sand.u32 %s52, 1
          %s188 = smul.addr %s187, 48
          %s189 = scalar_lea.vmem [#allocation4], %s188
          %s191 = ssub.s32 768, 768
          %192 = vsyncadd %s186, %s191
          %s193 = smul.addr %s16, 6
          %s194 = smul.addr %s193, 128
          %s195 = scalar_lea.hbm %s1, %s194
          %s196 = sshll.u32 %s189, 4
          %s197 = int_to_ptr.vmem [resolvable:$true] %s196
          %202 = dma.hbm_to_vmem [thread:$0]  %s195, 768, %s197, %s186, 128, 128, 8
        $region32: #{tpu_custom_call.1} parent=23 // pred_fallthru
          _
      $region24: #{tpu_custom_call.1} parent=5 // pred_fallthru
        _
      %p203 = scmp.le.s32.totalorder 1, %s16
      %p204 = scmp.lt.s32.totalorder %s16, 3
      %p205 = pnand %p203, %p204
      %p206 = pneg %p205
      // Predicated region
      $region33: #{tpu_custom_call.1} parent=5 // pred_check
        _
      $region34: #{tpu_custom_call.1} parent=5 // pred_check_branch
        %208 = sbr.rel (%p205) target = $region36
      $region35: #{tpu_custom_call.1} parent=5 // pred_region
        %s209 = ssub.s32 %s16, 1
        %s210 = sand.u32 %s29, 1
        %s211 = scalar_lea.sflag [#allocation3], %s210
        %s212 = sand.u32 %s29, 1
        %s213 = smul.addr %s212, 48
        %s214 = scalar_lea.vmem [#allocation2], %s213
        // Predicated region
        $region37: #{tpu_custom_call.1} parent=35 // pred_check
          %p215 = pneg %p42
        $region38: #{tpu_custom_call.1} parent=35 // pred_check_branch
          %217 = sbr.rel (%p215) target = $region40
        $region39: #{tpu_custom_call.1} parent=35 // pred_region
          %218 = dma.done %s211, 768
        $region40: #{tpu_custom_call.1} parent=35 // pred_fallthru
          _
        %s219 = sand.u32 %s55, 1
        %s220 = scalar_lea.sflag [#allocation5], %s219
        %s221 = sand.u32 %s55, 1
        %s222 = smul.addr %s221, 48
        %s223 = scalar_lea.vmem [#allocation4], %s222
        // Predicated region
        $region41: #{tpu_custom_call.1} parent=35 // pred_check
          %p224 = pneg %p68
        $region42: #{tpu_custom_call.1} parent=35 // pred_check_branch
          %226 = sbr.rel (%p224) target = $region44
        $region43: #{tpu_custom_call.1} parent=35 // pred_region
          %227 = dma.done %s220, 768
        $region44: #{tpu_custom_call.1} parent=35 // pred_fallthru
          _
        %s228 = sand.u32 %s29, 1
        %s229 = scalar_lea.sflag [#allocation3], %s228
        %s230 = sand.u32 %s29, 1
        %s231 = smul.addr %s230, 48
        %s232 = scalar_lea.vmem [#allocation2], %s231
        %p233 = pneg %p42
        %p234 = pneg %p39
        %s235 = sand.u32 %s55, 1
        %s236 = scalar_lea.sflag [#allocation5], %s235
        %s237 = sand.u32 %s55, 1
        %s238 = smul.addr %s237, 48
        %s239 = scalar_lea.vmem [#allocation4], %s238
        %p240 = pneg %p68
        %p241 = pneg %p65
        %p242 = pneg %p89
        %p243 = pneg %p86
        %p244 = pneg %p110
        %p245 = pneg %p107
        %p246 = pneg %p136
        %p247 = pneg %p133
        %p248 = scmp.lt.s32.totalorder %s21, 1
        %s249 = scalar_select %p248, %s21, 1
        %s250 = smul.addr %s249, 4
        %s251 = scalar_lea.vmem %s4, %s250
        %p252 = scmp.lt.s32.totalorder %s21, 1
        %s253 = scalar_select %p252, %s21, 1
        %s254 = smul.addr %s253, 4
        %s255 = scalar_lea.vmem %s4, %s254
        %v256 = vld [vmem:[%s2] sm:$0xff]
        %v257 = vld [vmem:[%s2 + $0x8] sm:$0xff]
        %v258 = vld [vmem:[%s3] sm:$0x3f]
        loop: start=0, step=1, limit=3
        $region45: #{tpu_custom_call.1} parent=35 // loop_pre_header
          _
        $region46: #{tpu_custom_call.1} parent=35 // loop_header
          %s260 = sphi 0, %s264
          %p261 = scmp.ge.s32.totalorder %s260, 3
          %s265 = sphi 0.0, %s295
          %s266 = sphi 0.0, %s845
          %v267 = vphi 0.0, %v303
          %v268 = vphi 0.0, %v304
          %v269 = vphi 0.0, %v307
          %v270 = vphi 0.0, %v308
        $region47: #{tpu_custom_call.1} parent=35 // loop_header_branch
          %263 = sbr.rel (%p261) target = $region51
        $region48: #{tpu_custom_call.1} parent=35 // loop_body
          %s271 = smul.u32 %s260, 16
          %s272 = scalar_lea.vmem %s214, %s271 [#allocation2]
          %v273 = vld [vmem:[%s272] sm:$0xff]
          %v274 = vld [vmem:[%s272 + $0x8] sm:$0xff]
          %s275 = scalar_lea.vmem %s223, %s271 [#allocation4]
          %v276 = vld [vmem:[%s275] sm:$0xff]
          %v277 = vld [vmem:[%s275 + $0x8] sm:$0xff]
          %v278 = vsub.f32 %v273, %v276
          %v279 = vsub.f32 %v274, %v277
          %v280 = vmul.f32 %v278, %v278
          %v281 = vmul.f32 %v279, %v279
          %vm282 = vcmask 130048
          %v283 = vsel %vm282, %v280, 0.0
          %v284 = vsel %vm282, %v281, 0.0
          %v285 = vadd.f32 %v283, %v284
          %286 = vadd.xlane.f32.xlu0 %v285
          %v287 = vpop.xlane.xlu0 %286
          %v288 = vrot.slane %v287, 4
          %v289 = vadd.f32 %v287, %v288
          %v290 = vrot.slane %v289, 2
          %v291 = vadd.f32 %v289, %v290
          %v292 = vrot.slane %v291, 1
          %v293 = vadd.f32 %v291, %v292
          %s294 = vtos %v293
          %s295 = sadd.f32 %s265, %s294
          %p296 = scmp.eq.s32.totalorder %s260, 0
          %p297 = scmp.eq.s32.totalorder %s260, 1
          %s298 = scalar_select %p297, 0.587, 0.114
          %s299 = scalar_select %p296, 0.299, %s298
          %v300 = vstv %s299
          %v301 = vmul.f32 %v300, %v273
          %v302 = vmul.f32 %v300, %v274
          %v303 = vadd.f32 %v267, %v301
          %v304 = vadd.f32 %v268, %v302
          %v305 = vmul.f32 %v300, %v276
          %v306 = vmul.f32 %v300, %v277
          %v307 = vadd.f32 %v269, %v305
          %v308 = vadd.f32 %v270, %v306
          %v309 = vmul.f32 %v273, %v273
          %v310 = vmul.f32 %v274, %v274
          %v311 = vmul.f32 %v276, %v276
          %v312 = vmul.f32 %v277, %v277
          %v313 = vmul.f32 %v273, %v276
          %v314 = vmul.f32 %v274, %v277
          %v316 = vsel %vm282, %v273, 0
          %v319 = vsel %vm282, %v274, 0
          %v322 = vsel %vm282, %v276, 0
          %v325 = vsel %vm282, %v277, 0
          %v328 = vsel %vm282, %v309, 0
          %v331 = vsel %vm282, %v310, 0
          %v334 = vsel %vm282, %v311, 0
          %v337 = vsel %vm282, %v312, 0
          %v340 = vsel %vm282, %v313, 0
          %v343 = vsel %vm282, %v314, 0
          %345 = vmatprep.subr.mxu0 0.0
          %346 = vmatpush1.msra.mxu0 0.0
          %347 = vmatprep.subr.mxu0 0.0
          %348 = vmatpush1.msra.mxu0 0.0
          %349 = vmatprep.subr.mxu0 0.0
          %350 = vmatpush1.msra.mxu0 0.0
          %351 = vmatprep.subr.mxu0 0.0
          %352 = vmatpush1.msra.mxu0 0.0
          %353 = vmatprep.subr.mxu0 0.0
          %354 = vmatpush1.msra.mxu0 0.0
          %355 = vmatprep.subr.mxu0 0.0
          %356 = vmatpush1.msra.mxu0 0.0
          %357 = vmatprep.subr.mxu0 0.0
          %358 = vmatpush1.msra.mxu0 0.0
          %359 = vmatprep.subr.mxu0 0.0
          %360 = vmatpush1.msra.mxu0 0.0
          %361 = vmatprep.subr.mxu0 0.0
          %362 = vmatpush1.msra.mxu0 0.0
          %363 = vmatprep.subr.mxu0 0.0
          %364 = vmatpush1.msra.mxu0 0.0
          %365 = vmatprep.subr.mxu0 0.0
          %366 = vmatpush1.msra.mxu0 0.0
          %367 = vmatprep.subr.mxu0 0.0
          %368 = vmatpush1.msra.mxu0 0.0
          %369 = vmatprep.subr.mxu0 0.0
          %370 = vmatpush1.msra.mxu0 0.0
          %371 = vmatprep.subr.mxu0 0.0
          %372 = vmatpush1.msra.mxu0 0.0
          %373 = vmatprep.subr.mxu0 0.0
          %374 = vmatpush1.msra.mxu0 %v257
          %375 = vmatprep.subr.mxu0 0.0
          %376 = vmatpush1.msra.mxu0 %v256
          %377 = vmatprep.subr.mxu0 0.0
          %378 = vmatpush2.msra.mxu0 0.0
          %379 = vmatprep.subr.mxu0 0.0
          %380 = vmatpush2.msra.mxu0 0.0
          %381 = vmatprep.subr.mxu0 0.0
          %382 = vmatpush2.msra.mxu0 0.0
          %383 = vmatprep.subr.mxu0 0.0
          %384 = vmatpush2.msra.mxu0 0.0
          %385 = vmatprep.subr.mxu0 0.0
          %386 = vmatpush2.msra.mxu0 0.0
          %387 = vmatprep.subr.mxu0 0.0
          %388 = vmatpush2.msra.mxu0 0.0
          %389 = vmatprep.subr.mxu0 0.0
          %390 = vmatpush2.msra.mxu0 0.0
          %391 = vmatprep.subr.mxu0 0.0
          %392 = vmatpush2.msra.mxu0 0.0
          %393 = vmatprep.subr.mxu0 0.0
          %394 = vmatpush2.msra.mxu0 0.0
          %395 = vmatprep.subr.mxu0 0.0
          %396 = vmatpush2.msra.mxu0 0.0
          %397 = vmatprep.subr.mxu0 0.0
          %398 = vmatpush2.msra.mxu0 0.0
          %399 = vmatprep.subr.mxu0 0.0
          %400 = vmatpush2.msra.mxu0 0.0
          %401 = vmatprep.subr.mxu0 0.0
          %402 = vmatpush2.msra.mxu0 0.0
          %403 = vmatprep.subr.mxu0 0.0
          %404 = vmatpush2.msra.mxu0 0.0
          %405 = vmatprep.subr.mxu0 0.0
          %406 = vmatpush2.msra.mxu0 0.0
          %407 = vmatprep.subr.mxu0 0.0
          %408 = vmatpush2.msra.mxu0 0.0
          %409 = vmatprep.mubr.f32.mxu0 0.0
          %410 = vmatmul.mubr.f32.gmra.mxu0 %v316
          %v411 = vpop.f32.mrf.mxu0
          %v412 = vadd.f32 0.0, %v411
          %v413 = vpop.f32.mrf.mxu0
          %414 = vmatprep.mubr.f32.mxu0 0.0
          %415 = vmatmul.mubr.f32.gmra.mxu0 %v319
          %v416 = vpop.f32.mrf.mxu0
          %v417 = vadd.f32 0.0, %v416
          %v418 = vpop.f32.mrf.mxu0
          %419 = vmatprep.mubr.f32.mxu0 0.0
          %420 = vmatmul.mubr.f32.gmra.mxu0 %v322
          %v421 = vpop.f32.mrf.mxu0
          %v422 = vadd.f32 0.0, %v421
          %v423 = vpop.f32.mrf.mxu0
          %424 = vmatprep.mubr.f32.mxu0 0.0
          %425 = vmatmul.mubr.f32.gmra.mxu0 %v325
          %v426 = vpop.f32.mrf.mxu0
          %v427 = vadd.f32 0.0, %v426
          %v428 = vpop.f32.mrf.mxu0
          %429 = vmatprep.mubr.f32.mxu0 0.0
          %430 = vmatmul.mubr.f32.gmra.mxu0 %v328
          %v431 = vpop.f32.mrf.mxu0
          %v432 = vadd.f32 0.0, %v431
          %v433 = vpop.f32.mrf.mxu0
          %434 = vmatprep.mubr.f32.mxu0 0.0
          %435 = vmatmul.mubr.f32.gmra.mxu0 %v331
          %v436 = vpop.f32.mrf.mxu0
          %v437 = vadd.f32 0.0, %v436
          %v438 = vpop.f32.mrf.mxu0
          %439 = vmatprep.mubr.f32.mxu0 0.0
          %440 = vmatmul.mubr.f32.gmra.mxu0 %v334
          %v441 = vpop.f32.mrf.mxu0
          %v442 = vadd.f32 0.0, %v441
          %v443 = vpop.f32.mrf.mxu0
          %444 = vmatprep.mubr.f32.mxu0 0.0
          %445 = vmatmul.mubr.f32.gmra.mxu0 %v337
          %v446 = vpop.f32.mrf.mxu0
          %v447 = vadd.f32 0.0, %v446
          %v448 = vpop.f32.mrf.mxu0
          %449 = vmatprep.mubr.f32.mxu0 0.0
          %450 = vmatmul.mubr.f32.gmra.mxu0 %v340
          %v451 = vpop.f32.mrf.mxu0
          %v452 = vadd.f32 0.0, %v451
          %v453 = vpop.f32.mrf.mxu0
          %454 = vmatprep.mubr.f32.mxu0 0.0
          %455 = vmatmul.mubr.f32.gmra.mxu0 %v343
          %v456 = vpop.f32.mrf.mxu0
          %v457 = vadd.f32 0.0, %v456
          %v458 = vpop.f32.mrf.mxu0
          %459 = vdwg.mxu0
          %v461 = vsel %vm282, %v258, 0
          %463 = vmatprep.subr.mxu0 0.0
          %464 = vmatpush1.msra.mxu0 0.0
          %465 = vmatprep.subr.mxu0 0.0
          %466 = vmatpush1.msra.mxu0 0.0
          %467 = vmatprep.subr.mxu0 0.0
          %468 = vmatpush1.msra.mxu0 0.0
          %469 = vmatprep.subr.mxu0 0.0
          %470 = vmatpush1.msra.mxu0 0.0
          %471 = vmatprep.subr.mxu0 0.0
          %472 = vmatpush1.msra.mxu0 0.0
          %473 = vmatprep.subr.mxu0 0.0
          %474 = vmatpush1.msra.mxu0 0.0
          %475 = vmatprep.subr.mxu0 0.0
          %476 = vmatpush1.msra.mxu0 0.0
          %477 = vmatprep.subr.mxu0 0.0
          %478 = vmatpush1.msra.mxu0 0.0
          %479 = vmatprep.subr.mxu0 0.0
          %480 = vmatpush1.msra.mxu0 0.0
          %481 = vmatprep.subr.mxu0 0.0
          %482 = vmatpush1.msra.mxu0 0.0
          %483 = vmatprep.subr.mxu0 0.0
          %484 = vmatpush1.msra.mxu0 0.0
          %485 = vmatprep.subr.mxu0 0.0
          %486 = vmatpush1.msra.mxu0 0.0
          %487 = vmatprep.subr.mxu0 0.0
          %488 = vmatpush1.msra.mxu0 0.0
          %489 = vmatprep.subr.mxu0 0.0
          %490 = vmatpush1.msra.mxu0 0.0
          %491 = vmatprep.subr.mxu0 0.0
          %492 = vmatpush1.msra.mxu0 %v417
          %493 = vmatprep.subr.mxu0 0.0
          %494 = vmatpush1.msra.mxu0 %v412
          %495 = vmatprep.subr.mxu0 0.0
          %496 = vmatpush2.msra.mxu0 0.0
          %497 = vmatprep.subr.mxu0 0.0
          %498 = vmatpush2.msra.mxu0 0.0
          %499 = vmatprep.subr.mxu0 0.0
          %500 = vmatpush2.msra.mxu0 0.0
          %501 = vmatprep.subr.mxu0 0.0
          %502 = vmatpush2.msra.mxu0 0.0
          %503 = vmatprep.subr.mxu0 0.0
          %504 = vmatpush2.msra.mxu0 0.0
          %505 = vmatprep.subr.mxu0 0.0
          %506 = vmatpush2.msra.mxu0 0.0
          %507 = vmatprep.subr.mxu0 0.0
          %508 = vmatpush2.msra.mxu0 0.0
          %509 = vmatprep.subr.mxu0 0.0
          %510 = vmatpush2.msra.mxu0 0.0
          %511 = vmatprep.subr.mxu0 0.0
          %512 = vmatpush2.msra.mxu0 0.0
          %513 = vmatprep.subr.mxu0 0.0
          %514 = vmatpush2.msra.mxu0 0.0
          %515 = vmatprep.subr.mxu0 0.0
          %516 = vmatpush2.msra.mxu0 0.0
          %517 = vmatprep.subr.mxu0 0.0
          %518 = vmatpush2.msra.mxu0 0.0
          %519 = vmatprep.subr.mxu0 0.0
          %520 = vmatpush2.msra.mxu0 0.0
          %521 = vmatprep.subr.mxu0 0.0
          %522 = vmatpush2.msra.mxu0 0.0
          %523 = vmatprep.subr.mxu0 0.0
          %524 = vmatpush2.msra.mxu0 0.0
          %525 = vmatprep.subr.mxu0 0.0
          %526 = vmatpush2.msra.mxu0 0.0
          %527 = vmatprep.mubr.f32.mxu0 0.0
          %528 = vmatmul.mubr.f32.gmra.mxu0 %v461
          %v529 = vpop.f32.mrf.mxu0
          %v530 = vadd.f32 0.0, %v529
          %v531 = vpop.f32.mrf.mxu0
          %532 = vdwg.mxu0
          %533 = vmatprep.subr.mxu0 0.0
          %534 = vmatpush1.msra.mxu0 0.0
          %535 = vmatprep.subr.mxu0 0.0
          %536 = vmatpush1.msra.mxu0 0.0
          %537 = vmatprep.subr.mxu0 0.0
          %538 = vmatpush1.msra.mxu0 0.0
          %539 = vmatprep.subr.mxu0 0.0
          %540 = vmatpush1.msra.mxu0 0.0
          %541 = vmatprep.subr.mxu0 0.0
          %542 = vmatpush1.msra.mxu0 0.0
          %543 = vmatprep.subr.mxu0 0.0
          %544 = vmatpush1.msra.mxu0 0.0
          %545 = vmatprep.subr.mxu0 0.0
          %546 = vmatpush1.msra.mxu0 0.0
          %547 = vmatprep.subr.mxu0 0.0
          %548 = vmatpush1.msra.mxu0 0.0
          %549 = vmatprep.subr.mxu0 0.0
          %550 = vmatpush1.msra.mxu0 0.0
          %551 = vmatprep.subr.mxu0 0.0
          %552 = vmatpush1.msra.mxu0 0.0
          %553 = vmatprep.subr.mxu0 0.0
          %554 = vmatpush1.msra.mxu0 0.0
          %555 = vmatprep.subr.mxu0 0.0
          %556 = vmatpush1.msra.mxu0 0.0
          %557 = vmatprep.subr.mxu0 0.0
          %558 = vmatpush1.msra.mxu0 0.0
          %559 = vmatprep.subr.mxu0 0.0
          %560 = vmatpush1.msra.mxu0 0.0
          %561 = vmatprep.subr.mxu0 0.0
          %562 = vmatpush1.msra.mxu0 %v427
          %563 = vmatprep.subr.mxu0 0.0
          %564 = vmatpush1.msra.mxu0 %v422
          %565 = vmatprep.subr.mxu0 0.0
          %566 = vmatpush2.msra.mxu0 0.0
          %567 = vmatprep.subr.mxu0 0.0
          %568 = vmatpush2.msra.mxu0 0.0
          %569 = vmatprep.subr.mxu0 0.0
          %570 = vmatpush2.msra.mxu0 0.0
          %571 = vmatprep.subr.mxu0 0.0
          %572 = vmatpush2.msra.mxu0 0.0
          %573 = vmatprep.subr.mxu0 0.0
          %574 = vmatpush2.msra.mxu0 0.0
          %575 = vmatprep.subr.mxu0 0.0
          %576 = vmatpush2.msra.mxu0 0.0
          %577 = vmatprep.subr.mxu0 0.0
          %578 = vmatpush2.msra.mxu0 0.0
          %579 = vmatprep.subr.mxu0 0.0
          %580 = vmatpush2.msra.mxu0 0.0
          %581 = vmatprep.subr.mxu0 0.0
          %582 = vmatpush2.msra.mxu0 0.0
          %583 = vmatprep.subr.mxu0 0.0
          %584 = vmatpush2.msra.mxu0 0.0
          %585 = vmatprep.subr.mxu0 0.0
          %586 = vmatpush2.msra.mxu0 0.0
          %587 = vmatprep.subr.mxu0 0.0
          %588 = vmatpush2.msra.mxu0 0.0
          %589 = vmatprep.subr.mxu0 0.0
          %590 = vmatpush2.msra.mxu0 0.0
          %591 = vmatprep.subr.mxu0 0.0
          %592 = vmatpush2.msra.mxu0 0.0
          %593 = vmatprep.subr.mxu0 0.0
          %594 = vmatpush2.msra.mxu0 0.0
          %595 = vmatprep.subr.mxu0 0.0
          %596 = vmatpush2.msra.mxu0 0.0
          %597 = vmatprep.mubr.f32.mxu0 0.0
          %598 = vmatmul.mubr.f32.gmra.mxu0 %v461
          %v599 = vpop.f32.mrf.mxu0
          %v600 = vadd.f32 0.0, %v599
          %v601 = vpop.f32.mrf.mxu0
          %602 = vdwg.mxu0
          %603 = vmatprep.subr.mxu0 0.0
          %604 = vmatpush1.msra.mxu0 0.0
          %605 = vmatprep.subr.mxu0 0.0
          %606 = vmatpush1.msra.mxu0 0.0
          %607 = vmatprep.subr.mxu0 0.0
          %608 = vmatpush1.msra.mxu0 0.0
          %609 = vmatprep.subr.mxu0 0.0
          %610 = vmatpush1.msra.mxu0 0.0
          %611 = vmatprep.subr.mxu0 0.0
          %612 = vmatpush1.msra.mxu0 0.0
          %613 = vmatprep.subr.mxu0 0.0
          %614 = vmatpush1.msra.mxu0 0.0
          %615 = vmatprep.subr.mxu0 0.0
          %616 = vmatpush1.msra.mxu0 0.0
          %617 = vmatprep.subr.mxu0 0.0
          %618 = vmatpush1.msra.mxu0 0.0
          %619 = vmatprep.subr.mxu0 0.0
          %620 = vmatpush1.msra.mxu0 0.0
          %621 = vmatprep.subr.mxu0 0.0
          %622 = vmatpush1.msra.mxu0 0.0
          %623 = vmatprep.subr.mxu0 0.0
          %624 = vmatpush1.msra.mxu0 0.0
          %625 = vmatprep.subr.mxu0 0.0
          %626 = vmatpush1.msra.mxu0 0.0
          %627 = vmatprep.subr.mxu0 0.0
          %628 = vmatpush1.msra.mxu0 0.0
          %629 = vmatprep.subr.mxu0 0.0
          %630 = vmatpush1.msra.mxu0 0.0
          %631 = vmatprep.subr.mxu0 0.0
          %632 = vmatpush1.msra.mxu0 %v437
          %633 = vmatprep.subr.mxu0 0.0
          %634 = vmatpush1.msra.mxu0 %v432
          %635 = vmatprep.subr.mxu0 0.0
          %636 = vmatpush2.msra.mxu0 0.0
          %637 = vmatprep.subr.mxu0 0.0
          %638 = vmatpush2.msra.mxu0 0.0
          %639 = vmatprep.subr.mxu0 0.0
          %640 = vmatpush2.msra.mxu0 0.0
          %641 = vmatprep.subr.mxu0 0.0
          %642 = vmatpush2.msra.mxu0 0.0
          %643 = vmatprep.subr.mxu0 0.0
          %644 = vmatpush2.msra.mxu0 0.0
          %645 = vmatprep.subr.mxu0 0.0
          %646 = vmatpush2.msra.mxu0 0.0
          %647 = vmatprep.subr.mxu0 0.0
          %648 = vmatpush2.msra.mxu0 0.0
          %649 = vmatprep.subr.mxu0 0.0
          %650 = vmatpush2.msra.mxu0 0.0
          %651 = vmatprep.subr.mxu0 0.0
          %652 = vmatpush2.msra.mxu0 0.0
          %653 = vmatprep.subr.mxu0 0.0
          %654 = vmatpush2.msra.mxu0 0.0
          %655 = vmatprep.subr.mxu0 0.0
          %656 = vmatpush2.msra.mxu0 0.0
          %657 = vmatprep.subr.mxu0 0.0
          %658 = vmatpush2.msra.mxu0 0.0
          %659 = vmatprep.subr.mxu0 0.0
          %660 = vmatpush2.msra.mxu0 0.0
          %661 = vmatprep.subr.mxu0 0.0
          %662 = vmatpush2.msra.mxu0 0.0
          %663 = vmatprep.subr.mxu0 0.0
          %664 = vmatpush2.msra.mxu0 0.0
          %665 = vmatprep.subr.mxu0 0.0
          %666 = vmatpush2.msra.mxu0 0.0
          %667 = vmatprep.mubr.f32.mxu0 0.0
          %668 = vmatmul.mubr.f32.gmra.mxu0 %v461
          %v669 = vpop.f32.mrf.mxu0
          %v670 = vadd.f32 0.0, %v669
          %v671 = vpop.f32.mrf.mxu0
          %672 = vdwg.mxu0
          %673 = vmatprep.subr.mxu0 0.0
          %674 = vmatpush1.msra.mxu0 0.0
          %675 = vmatprep.subr.mxu0 0.0
          %676 = vmatpush1.msra.mxu0 0.0
          %677 = vmatprep.subr.mxu0 0.0
          %678 = vmatpush1.msra.mxu0 0.0
          %679 = vmatprep.subr.mxu0 0.0
          %680 = vmatpush1.msra.mxu0 0.0
          %681 = vmatprep.subr.mxu0 0.0
          %682 = vmatpush1.msra.mxu0 0.0
          %683 = vmatprep.subr.mxu0 0.0
          %684 = vmatpush1.msra.mxu0 0.0
          %685 = vmatprep.subr.mxu0 0.0
          %686 = vmatpush1.msra.mxu0 0.0
          %687 = vmatprep.subr.mxu0 0.0
          %688 = vmatpush1.msra.mxu0 0.0
          %689 = vmatprep.subr.mxu0 0.0
          %690 = vmatpush1.msra.mxu0 0.0
          %691 = vmatprep.subr.mxu0 0.0
          %692 = vmatpush1.msra.mxu0 0.0
          %693 = vmatprep.subr.mxu0 0.0
          %694 = vmatpush1.msra.mxu0 0.0
          %695 = vmatprep.subr.mxu0 0.0
          %696 = vmatpush1.msra.mxu0 0.0
          %697 = vmatprep.subr.mxu0 0.0
          %698 = vmatpush1.msra.mxu0 0.0
          %699 = vmatprep.subr.mxu0 0.0
          %700 = vmatpush1.msra.mxu0 0.0
          %701 = vmatprep.subr.mxu0 0.0
          %702 = vmatpush1.msra.mxu0 %v447
          %703 = vmatprep.subr.mxu0 0.0
          %704 = vmatpush1.msra.mxu0 %v442
          %705 = vmatprep.subr.mxu0 0.0
          %706 = vmatpush2.msra.mxu0 0.0
          %707 = vmatprep.subr.mxu0 0.0
          %708 = vmatpush2.msra.mxu0 0.0
          %709 = vmatprep.subr.mxu0 0.0
          %710 = vmatpush2.msra.mxu0 0.0
          %711 = vmatprep.subr.mxu0 0.0
          %712 = vmatpush2.msra.mxu0 0.0
          %713 = vmatprep.subr.mxu0 0.0
          %714 = vmatpush2.msra.mxu0 0.0
          %715 = vmatprep.subr.mxu0 0.0
          %716 = vmatpush2.msra.mxu0 0.0
          %717 = vmatprep.subr.mxu0 0.0
          %718 = vmatpush2.msra.mxu0 0.0
          %719 = vmatprep.subr.mxu0 0.0
          %720 = vmatpush2.msra.mxu0 0.0
          %721 = vmatprep.subr.mxu0 0.0
          %722 = vmatpush2.msra.mxu0 0.0
          %723 = vmatprep.subr.mxu0 0.0
          %724 = vmatpush2.msra.mxu0 0.0
          %725 = vmatprep.subr.mxu0 0.0
          %726 = vmatpush2.msra.mxu0 0.0
          %727 = vmatprep.subr.mxu0 0.0
          %728 = vmatpush2.msra.mxu0 0.0
          %729 = vmatprep.subr.mxu0 0.0
          %730 = vmatpush2.msra.mxu0 0.0
          %731 = vmatprep.subr.mxu0 0.0
          %732 = vmatpush2.msra.mxu0 0.0
          %733 = vmatprep.subr.mxu0 0.0
          %734 = vmatpush2.msra.mxu0 0.0
          %735 = vmatprep.subr.mxu0 0.0
          %736 = vmatpush2.msra.mxu0 0.0
          %737 = vmatprep.mubr.f32.mxu0 0.0
          %738 = vmatmul.mubr.f32.gmra.mxu0 %v461
          %v739 = vpop.f32.mrf.mxu0
          %v740 = vadd.f32 0.0, %v739
          %v741 = vpop.f32.mrf.mxu0
          %742 = vdwg.mxu0
          %743 = vmatprep.subr.mxu0 0.0
          %744 = vmatpush1.msra.mxu0 0.0
          %745 = vmatprep.subr.mxu0 0.0
          %746 = vmatpush1.msra.mxu0 0.0
          %747 = vmatprep.subr.mxu0 0.0
          %748 = vmatpush1.msra.mxu0 0.0
          %749 = vmatprep.subr.mxu0 0.0
          %750 = vmatpush1.msra.mxu0 0.0
          %751 = vmatprep.subr.mxu0 0.0
          %752 = vmatpush1.msra.mxu0 0.0
          %753 = vmatprep.subr.mxu0 0.0
          %754 = vmatpush1.msra.mxu0 0.0
          %755 = vmatprep.subr.mxu0 0.0
          %756 = vmatpush1.msra.mxu0 0.0
          %757 = vmatprep.subr.mxu0 0.0
          %758 = vmatpush1.msra.mxu0 0.0
          %759 = vmatprep.subr.mxu0 0.0
          %760 = vmatpush1.msra.mxu0 0.0
          %761 = vmatprep.subr.mxu0 0.0
          %762 = vmatpush1.msra.mxu0 0.0
          %763 = vmatprep.subr.mxu0 0.0
          %764 = vmatpush1.msra.mxu0 0.0
          %765 = vmatprep.subr.mxu0 0.0
          %766 = vmatpush1.msra.mxu0 0.0
          %767 = vmatprep.subr.mxu0 0.0
          %768 = vmatpush1.msra.mxu0 0.0
          %769 = vmatprep.subr.mxu0 0.0
          %770 = vmatpush1.msra.mxu0 0.0
          %771 = vmatprep.subr.mxu0 0.0
          %772 = vmatpush1.msra.mxu0 %v457
          %773 = vmatprep.subr.mxu0 0.0
          %774 = vmatpush1.msra.mxu0 %v452
          %775 = vmatprep.subr.mxu0 0.0
          %776 = vmatpush2.msra.mxu0 0.0
          %777 = vmatprep.subr.mxu0 0.0
          %778 = vmatpush2.msra.mxu0 0.0
          %779 = vmatprep.subr.mxu0 0.0
          %780 = vmatpush2.msra.mxu0 0.0
          %781 = vmatprep.subr.mxu0 0.0
          %782 = vmatpush2.msra.mxu0 0.0
          %783 = vmatprep.subr.mxu0 0.0
          %784 = vmatpush2.msra.mxu0 0.0
          %785 = vmatprep.subr.mxu0 0.0
          %786 = vmatpush2.msra.mxu0 0.0
          %787 = vmatprep.subr.mxu0 0.0
          %788 = vmatpush2.msra.mxu0 0.0
          %789 = vmatprep.subr.mxu0 0.0
          %790 = vmatpush2.msra.mxu0 0.0
          %791 = vmatprep.subr.mxu0 0.0
          %792 = vmatpush2.msra.mxu0 0.0
          %793 = vmatprep.subr.mxu0 0.0
          %794 = vmatpush2.msra.mxu0 0.0
          %795 = vmatprep.subr.mxu0 0.0
          %796 = vmatpush2.msra.mxu0 0.0
          %797 = vmatprep.subr.mxu0 0.0
          %798 = vmatpush2.msra.mxu0 0.0
          %799 = vmatprep.subr.mxu0 0.0
          %800 = vmatpush2.msra.mxu0 0.0
          %801 = vmatprep.subr.mxu0 0.0
          %802 = vmatpush2.msra.mxu0 0.0
          %803 = vmatprep.subr.mxu0 0.0
          %804 = vmatpush2.msra.mxu0 0.0
          %805 = vmatprep.subr.mxu0 0.0
          %806 = vmatpush2.msra.mxu0 0.0
          %807 = vmatprep.mubr.f32.mxu0 0.0
          %808 = vmatmul.mubr.f32.gmra.mxu0 %v461
          %v809 = vpop.f32.mrf.mxu0
          %v810 = vadd.f32 0.0, %v809
          %v811 = vpop.f32.mrf.mxu0
          %812 = vdwg.mxu0
          %v813 = vmul.f32 %v530, %v530
          %v814 = vmul.f32 %v600, %v600
          %v815 = vmul.f32 %v530, %v600
          %v816 = vsub.f32 %v670, %v813
          %v817 = vsub.f32 %v740, %v814
          %v818 = vsub.f32 %v810, %v815
          %v819 = vmul.f32 %v815, 2.0
          %v820 = vadd.f32 %v819, 0.0001
          %v821 = vmul.f32 %v818, 2.0
          %v822 = vadd.f32 %v821, 0.0009
          %v823 = vmul.f32 %v820, %v822
          %v824 = vadd.f32 %v813, %v814
          %v825 = vadd.f32 %v824, 0.0001
          %v826 = vadd.f32 %v816, %v817
          %v827 = vadd.f32 %v826, 0.0009
          %v828 = vmul.f32 %v825, %v827
          %v829 = vrcp.pop %v828
          %v830 = vmul.f32 %v828, %v829
          %v831 = vsub.f32 2.0, %v830
          %v832 = vmul.f32 %v829, %v831
          %v833 = vmul.f32 %v823, %v832
          %vm834 = vcmask 46080
          %v835 = vsel %vm834, %v833, 0.0
          %836 = vadd.xlane.f32.xlu0 %v835
          %v837 = vpop.xlane.xlu0 %836
          %v838 = vrot.slane %v837, 4
          %v839 = vadd.f32 %v837, %v838
          %v840 = vrot.slane %v839, 2
          %v841 = vadd.f32 %v839, %v840
          %v842 = vrot.slane %v841, 1
          %v843 = vadd.f32 %v841, %v842
          %s844 = vtos %v843
          %s845 = sadd.f32 %s266, %s844
        $region49: #{tpu_custom_call.1} parent=35 // loop_footer
          %s264 = sadd.s32 1, %s260
        $region50: #{tpu_custom_call.1} parent=35 // loop_footer_branch
          %259 = sbr.rel target = $region46
        $region51: #{tpu_custom_call.1} parent=35 // loop_exit
          _
        %848 = vrot.lane.b32.xlu0 %v267, 1
        %v849 = vpop.permute.xlu0 %848
        %850 = vrot.lane.b32.xlu0 %v268, 1
        %v851 = vpop.permute.xlu0 %850
        %v854 = vsub.f32 %v267, %v849
        %v855 = vsub.f32 %v268, %v851
        %v856 = vand.u32 2147483647, %v854
        %v857 = vand.u32 2147483647, %v855
        %860 = vrot.lane.b32.xlu0 %v269, 1
        %v861 = vpop.permute.xlu0 %860
        %862 = vrot.lane.b32.xlu0 %v270, 1
        %v863 = vpop.permute.xlu0 %862
        %v866 = vsub.f32 %v269, %v861
        %v867 = vsub.f32 %v270, %v863
        %v868 = vand.u32 2147483647, %v866
        %v869 = vand.u32 2147483647, %v867
        %vm870 = vcmask 1040384
        %v871 = vrot.slane %v267, 7
        %v872 = vrot.slane %v268, 7
        %v873 = vsel %vm870, %v871, %v872
        %v876 = vsub.f32 %v267, %v871
        %v877 = vsub.f32 %v268, %v873
        %v878 = vand.u32 2147483647, %v876
        %v879 = vand.u32 2147483647, %v877
        %v880 = vrot.slane %v269, 7
        %v881 = vrot.slane %v270, 7
        %v882 = vsel %vm870, %v880, %v881
        %v885 = vsub.f32 %v269, %v880
        %v886 = vsub.f32 %v270, %v882
        %v887 = vand.u32 2147483647, %v885
        %v888 = vand.u32 2147483647, %v886
        %v889 = vsub.f32 %v856, %v868
        %v890 = vsub.f32 %v857, %v869
        %v891 = vmul.f32 %v889, %v889
        %v892 = vmul.f32 %v890, %v890
        %v893 = vsub.f32 %v878, %v887
        %v894 = vsub.f32 %v879, %v888
        %v895 = vmul.f32 %v893, %v893
        %v896 = vmul.f32 %v894, %v894
        %v897 = vadd.f32 %v891, %v895
        %v898 = vadd.f32 %v892, %v896
        %vm901 = vcmask 1046528
        %v902 = vrot.slane %v897, 1
        %v903 = vrot.slane %v898, 1
        %v904 = vsel %vm901, %v902, %v903
        %905 = vrot.lane.b32.xlu0 %v904, 127
        %v906 = vpop.permute.xlu0 %905
        %907 = vrot.lane.b32.xlu0 %v903, 127
        %v908 = vpop.permute.xlu0 %907
        %vm911 = vcmask 121856
        %v912 = vsel %vm911, %v906, 0.0
        %vm913 = vcmask 120832
        %v914 = vsel %vm913, %v908, 0.0
        %v915 = vadd.f32 %v912, %v914
        %916 = vadd.xlane.f32.xlu0 %v915
        %v917 = vpop.xlane.xlu0 %916
        %v918 = vrot.slane %v917, 4
        %v919 = vadd.f32 %v917, %v918
        %v920 = vrot.slane %v919, 2
        %v921 = vadd.f32 %v919, %v920
        %v922 = vrot.slane %v921, 1
        %v923 = vadd.f32 %v921, %v922
        %s924 = vtos %v923
        %v925 = vstv %s265
        %v926 = vstv %s924
        %v927 = vstv %s266
        %v928 = vsel %vm870, %v925, %v926
        %vm929 = vcmask 1041408
        %v930 = vsel %vm929, %v928, %v927
        %931 = vst [vmem:[%s255] sm:$0x7] %v930
        %p932 = scmp.lt.s32.totalorder %s21, 1
        %s933 = scalar_select %p932, %s21, 1
        %s934 = smul.addr %s933, 4
        %s935 = scalar_lea.vmem %s4, %s934
        // Predicated region
        $region52: #{tpu_custom_call.1} parent=35 // pred_check
          %p936 = pneg %p133
        $region53: #{tpu_custom_call.1} parent=35 // pred_check_branch
          %938 = sbr.rel (%p936) target = $region55
        $region54: #{tpu_custom_call.1} parent=35 // pred_region
          _
        $region55: #{tpu_custom_call.1} parent=35 // pred_fallthru
          _
      $region36: #{tpu_custom_call.1} parent=5 // pred_fallthru
        _
      %p939 = scmp.le.s32.totalorder 2, %s16
      // Predicated region
      $region56: #{tpu_custom_call.1} parent=5 // pred_check
        %p940 = pneg %p939
      $region57: #{tpu_custom_call.1} parent=5 // pred_check_branch
        %942 = sbr.rel (%p940) target = $region59
      $region58: #{tpu_custom_call.1} parent=5 // pred_region
        %s943 = ssub.s32 %s16, 2
        // Predicated region
        $region60: #{tpu_custom_call.1} parent=58 // pred_check
          %p944 = pneg %p139
        $region61: #{tpu_custom_call.1} parent=58 // pred_check_branch
          %946 = sbr.rel (%p944) target = $region63
        $region62: #{tpu_custom_call.1} parent=58 // pred_region
          %p947 = scmp.lt.s32.totalorder %s22, 1
          %s948 = scalar_select %p947, %s22, 1
          %s949 = smul.addr %s948, 4
          %s950 = scalar_lea.vmem %s4, %s949
        $region63: #{tpu_custom_call.1} parent=58 // pred_fallthru
          _
      $region59: #{tpu_custom_call.1} parent=5 // pred_fallthru
        _
    $region6: #{tpu_custom_call.1} parent=1 // loop_footer
      %s20 = sadd.s32 1, %s16
    $region7: #{tpu_custom_call.1} parent=1 // loop_footer_branch
      %15 = sbr.rel target = $region3
    $region8: #{tpu_custom_call.1} parent=1 // loop_exit
      _
    %951 = vsyncpa [#allocation3], 1
    %s952 = scalar_lea.sflag [#allocation3], 1
    %953 = vsyncpa %s952, 1
    %954 = vsyncpa [#allocation5], 1
    %s955 = scalar_lea.sflag [#allocation5], 1
    %956 = vsyncpa %s955, 1

</llo_original>
